<compile_context>
chip_gen: v5e
topology: v5e:2x2
jax: 0.10.0
libtpu: 0.0.40
codegen_flags: <defaults>
</compile_context>

<pallas_src>
import math
import functools

import jax
import jax.numpy as jnp
from jax.experimental import pallas as pl
from jax.experimental.pallas import tpu as pltpu


def _round_up(a: int, b: int) -> int:
    return (a + b - 1) // b * b


def _proj_lse_kernel(x_ref, w_ref, b_ref, logits_ref, lse_ref,
                     acc_ref, m_ref, l_ref):
    # x_ref: (tm, tk), w_ref: (tk, tv), b_ref: (1, tv)
    # logits_ref: (tm, tv) raw logits output, lse_ref: (tm, 1) per-row logsumexp
    # acc_ref: (tm, tv) f32 matmul accumulator, m_ref/l_ref: (tm, 1) online max/sum
    j = pl.program_id(1)          # vocab tile
    k = pl.program_id(2)          # d_model (reduction) tile
    nv = pl.num_programs(1)
    nk = pl.num_programs(2)

    @pl.when(jnp.logical_and(j == 0, k == 0))
    def _():  # new row tile: reset online-softmax state
        m_ref[...] = jnp.full(m_ref.shape, -jnp.inf, dtype=m_ref.dtype)
        l_ref[...] = jnp.zeros_like(l_ref)

    @pl.when(k == 0)
    def _():  # new vocab tile: reset matmul accumulator
        acc_ref[...] = jnp.zeros_like(acc_ref)

    acc_ref[...] += jnp.dot(x_ref[...], w_ref[...],
                            preferred_element_type=jnp.float32)

    @pl.when(k == nk - 1)
    def _():  # finalize this vocab tile: bias once, emit raw logits, update LSE
        logits = acc_ref[...] + b_ref[...]
        logits_ref[...] = logits
        m_prev = m_ref[...]
        m_new = jnp.maximum(m_prev, jnp.max(logits, axis=-1, keepdims=True))
        l_ref[...] = (l_ref[...] * jnp.exp(m_prev - m_new)
                      + jnp.sum(jnp.exp(logits - m_new), axis=-1, keepdims=True))
        m_ref[...] = m_new

    @pl.when(jnp.logical_and(k == nk - 1, j == nv - 1))
    def _():  # last vocab tile of this row tile: emit per-row LSE
        lse_ref[...] = m_ref[...] + jnp.log(l_ref[...])


def _log_softmax_finalize_kernel(logits_ref, lse_ref, out_ref):
    # out = logits - logsumexp(row), cast to the output dtype
    out_ref[...] = (logits_ref[...] - lse_ref[...]).astype(out_ref.dtype)


def projec_layer_forward(x, weight, bias, *,
                         tm=256,            # row tile: 256 (v6e/v7x), use 128 on v5e
                         tv=2048,           # vocab tile (multiple of 128)
                         tk=512,            # d_model tile (multiple of 128 when tiled)
                         matmul_dtype=None, # e.g. jnp.bfloat16 on v6e/v7x
                         out_dtype=None):   # e.g. jnp.bfloat16 log-probs
    """x: (..., D); weight: (D, V) (= PyTorch weight.T); bias: (V,).
    Returns log_softmax(x @ weight + bias, axis=-1) with shape (..., V)."""
    *lead, D = x.shape
    V = weight.shape[1]
    M = 1
    for s in lead:
        M *= s
    matmul_dtype = matmul_dtype or x.dtype
    out_dtype = out_dtype or x.dtype

    x2d = x.reshape(M, D).astype(matmul_dtype)
    w = weight.astype(matmul_dtype)
    b = bias.astype(jnp.float32).reshape(1, V)

    # Effective tiles, clamped for small problems, respecting the (8, 128) rules.
    tm_e = min(_round_up(tm, 8), _round_up(M, 8))
    tv_e = min(_round_up(tv, 128), _round_up(V, 128))
    tk_e = D if D <= tk else _round_up(tk, 128)

    Mp = _round_up(M, tm_e)
    Vp = _round_up(V, tv_e)
    Dp = _round_up(D, tk_e)

    # Zero-pad rows / d_model (contribute nothing); pad vocab columns with a very
    # negative bias so they vanish from the LSE (exp underflows to 0 exactly).
    if (Mp, Dp) != (M, D):
        x2d = jnp.pad(x2d, ((0, Mp - M), (0, Dp - D)))
    if (Dp, Vp) != (D, V):
        w = jnp.pad(w, ((0, Dp - D), (0, Vp - V)))
    if Vp != V:
        b = jnp.pad(b, ((0, 0), (0, Vp - V)), constant_values=-1e30)

    nm, nv, nk = Mp // tm_e, Vp // tv_e, Dp // tk_e

    # Explicit VMEM budget from the chosen tiles (double-buffered streams + scratch),
    # with ~30% headroom; floor of 16 MiB keeps the compiler comfortable on all gens.
    isz = jnp.dtype(matmul_dtype).itemsize
    vmem_need = (2 * tm_e * tk_e * isz          # x tile
                 + 2 * tk_e * tv_e * isz        # weight tile
                 + 2 * tv_e * 4                 # bias tile
                 + 2 * tm_e * tv_e * 4          # logits output tile
                 + 2 * tm_e * 4                 # lse output tile
                 + tm_e * tv_e * 4              # f32 accumulator scratch
                 + 4 * tm_e * 4)                # m/l scratch
    vmem_limit = max(16 << 20, min(int(vmem_need * 1.3), 100 << 20))

    logits, lse = pl.pallas_call(
        _proj_lse_kernel,
        out_shape=(jax.ShapeDtypeStruct((Mp, Vp), jnp.float32),
                   jax.ShapeDtypeStruct((Mp, 1), jnp.float32)),
        grid_spec=pltpu.PrefetchScalarGridSpec(
            num_scalar_prefetch=0,
            grid=(nm, nv, nk),
            in_specs=[
                pl.BlockSpec((tm_e, tk_e), lambda i, j, k: (i, k)),   # activations
                pl.BlockSpec((tk_e, tv_e), lambda i, j, k: (k, j)),   # streamed weight
                pl.BlockSpec((1, tv_e), lambda i, j, k: (0, j)),      # bias tile
            ],
            out_specs=[
                pl.BlockSpec((tm_e, tv_e), lambda i, j, k: (i, j)),   # raw logits
                pl.BlockSpec((tm_e, 1), lambda i, j, k: (i, 0)),      # per-row LSE
            ],
            scratch_shapes=[
                pltpu.VMEM((tm_e, tv_e), jnp.float32),   # matmul accumulator
                pltpu.VMEM((tm_e, 1), jnp.float32),      # running max
                pltpu.VMEM((tm_e, 1), jnp.float32),      # running sum
            ],
        ),
        compiler_params=pltpu.CompilerParams(
            dimension_semantics=("parallel", "arbitrary", "arbitrary"),
            vmem_limit_bytes=vmem_limit,
        ),
    )(x2d, w, b)

    out = pl.pallas_call(
        _log_softmax_finalize_kernel,
        out_shape=jax.ShapeDtypeStruct((Mp, Vp), out_dtype),
        grid_spec=pltpu.PrefetchScalarGridSpec(
            num_scalar_prefetch=0,
            grid=(nm, nv),
            in_specs=[
                pl.BlockSpec((tm_e, tv_e), lambda i, j: (i, j)),
                pl.BlockSpec((tm_e, 1), lambda i, j: (i, 0)),
            ],
            out_specs=pl.BlockSpec((tm_e, tv_e), lambda i, j: (i, j)),
        ),
        compiler_params=pltpu.CompilerParams(
            dimension_semantics=("parallel", "parallel"),
            vmem_limit_bytes=vmem_limit,
        ),
    )(logits, lse)

    return out[:M, :V].reshape(*lead, V)


if __name__ == "__main__":
    # Small shapes consistent with the module: batch=2, seq=8, d_model=32, vocab=128
    B, S, D, V = 2, 8, 32, 128

    key = jax.random.PRNGKey(0)
    kx, kw, kb = jax.random.split(key, 3)

    # Deterministic param init mimicking nn.Linear: U(-1/sqrt(D), 1/sqrt(D)).
    # Weight is stored as (D, V) = transpose of PyTorch's (V, D).
    bound = 1.0 / math.sqrt(D)
    weight = jax.random.uniform(kw, (D, V), jnp.float32, -bound, bound)
    bias = jax.random.uniform(kb, (V,), jnp.float32, -bound, bound)
    x = jax.random.normal(kx, (B, S, D), jnp.float32)

    out = projec_layer_forward(x, weight, bias)
    jax.block_until_ready(out)
    ref = jax.nn.log_softmax(x @ weight + bias, axis=-1)
    assert out.shape == (B, S, V)
    assert float(jnp.max(jnp.abs(out - ref))) < 1e-4

    # Ragged shapes: exercise row/vocab padding (no M % tm or V % 128 restriction).
    B2, S2, V2 = 2, 7, 100
    w2 = jax.random.uniform(kw, (D, V2), jnp.float32, -bound, bound)
    b2 = jax.random.uniform(kb, (V2,), jnp.float32, -bound, bound)
    x2 = jax.random.normal(kx, (B2, S2, D), jnp.float32)
    out2 = projec_layer_forward(x2, w2, b2)
    jax.block_until_ready(out2)
    ref2 = jax.nn.log_softmax(x2 @ w2 + b2, axis=-1)
    assert out2.shape == (B2, S2, V2)
    assert float(jnp.max(jnp.abs(out2 - ref2))) < 1e-4

    # bf16 matmul operands (v6e/v7x MXU path); softmax math stays f32.
    out_bf16 = projec_layer_forward(x, weight, bias, matmul_dtype=jnp.bfloat16)
    jax.block_until_ready(out_bf16)
    assert float(jnp.max(jnp.abs(out_bf16.astype(jnp.float32) - ref))) < 5e-2

    print("KERNEL_OK")
</pallas_src>

<mosaic_0001>
module attributes {stable_mosaic.version = 11 : i64} {
  func.func @_proj_lse_kernel(%arg0: i32, %arg1: i32, %arg2: i32, %arg3: memref<16x32xf32, #tpu.memory_space<vmem>>, %arg4: memref<32x128xf32, #tpu.memory_space<vmem>>, %arg5: memref<1x128xf32, #tpu.memory_space<vmem>>, %arg6: memref<16x128xf32, #tpu.memory_space<vmem>>, %arg7: memref<16x1xf32, #tpu.memory_space<vmem>>, %arg8: memref<16x128xf32, #tpu.memory_space<vmem>>, %arg9: memref<16x1xf32, #tpu.memory_space<vmem>>, %arg10: memref<16x1xf32, #tpu.memory_space<vmem>>) attributes {dimension_semantics = [#tpu.dimension_semantics<parallel>, #tpu.dimension_semantics<arbitrary>, #tpu.dimension_semantics<arbitrary>], iteration_bounds = array<i64: 1, 1, 1>, scalar_prefetch = 0 : i64, scratch_operands = 3 : i64, tpu.core_type = #tpu.core_type<tc>, window_params = [{transform_indices = @transform_0, window_bounds = array<i64: 16, 32>}, {transform_indices = @transform_1, window_bounds = array<i64: 32, 128>}, {transform_indices = @transform_2, window_bounds = array<i64: 1, 128>}, {transform_indices = @transform_3, window_bounds = array<i64: 16, 128>}, {transform_indices = @transform_4, window_bounds = array<i64: 16, 1>}]} {
    %c0_i32 = arith.constant 0 : i32
    %0 = arith.cmpi eq, %arg1, %c0_i32 : i32
    %c0_i32_0 = arith.constant 0 : i32
    %1 = arith.cmpi eq, %arg2, %c0_i32_0 : i32
    %2 = arith.andi %0, %1 : i1
    %3 = arith.extui %2 : i1 to i32
    %c0_i32_1 = arith.constant 0 : i32
    %4 = arith.cmpi ne, %3, %c0_i32_1 : i32
    scf.if %4 {
      %cst_16 = arith.constant 0xFF800000 : f32
      %22 = vector.broadcast %cst_16 : f32 to vector<16x1xf32>
      %c0_17 = arith.constant 0 : index
      %c0_18 = arith.constant 0 : index
      %23 = vector.load %arg9[%c0_17, %c0_18] : memref<16x1xf32, #tpu.memory_space<vmem>>, vector<16x1xf32>
      tpu.vector_store %arg9[%c0_17, %c0_18], %22 {strides = array<i32>} : memref<16x1xf32, #tpu.memory_space<vmem>>, vector<16x1xf32>,
      %cst_19 = arith.constant 0.000000e+00 : f32
      %24 = vector.broadcast %cst_19 : f32 to vector<16x1xf32>
      %c0_20 = arith.constant 0 : index
      %c0_21 = arith.constant 0 : index
      %25 = vector.load %arg10[%c0_20, %c0_21] : memref<16x1xf32, #tpu.memory_space<vmem>>, vector<16x1xf32>
      tpu.vector_store %arg10[%c0_20, %c0_21], %24 {strides = array<i32>} : memref<16x1xf32, #tpu.memory_space<vmem>>, vector<16x1xf32>,
    } else {
    }
    %c0_i32_2 = arith.constant 0 : i32
    %5 = arith.cmpi eq, %arg2, %c0_i32_2 : i32
    %6 = arith.extui %5 : i1 to i32
    %c0_i32_3 = arith.constant 0 : i32
    %7 = arith.cmpi ne, %6, %c0_i32_3 : i32
    scf.if %7 {
      %cst_16 = arith.constant 0.000000e+00 : f32
      %22 = vector.broadcast %cst_16 : f32 to vector<16x128xf32>
      %c0_17 = arith.constant 0 : index
      %c0_18 = arith.constant 0 : index
      %23 = vector.load %arg8[%c0_17, %c0_18] : memref<16x128xf32, #tpu.memory_space<vmem>>, vector<16x128xf32>
      tpu.vector_store %arg8[%c0_17, %c0_18], %22 {strides = array<i32>} : memref<16x128xf32, #tpu.memory_space<vmem>>, vector<16x128xf32>,
    } else {
    }
    %c0 = arith.constant 0 : index
    %c0_4 = arith.constant 0 : index
    %8 = vector.load %arg8[%c0, %c0_4] : memref<16x128xf32, #tpu.memory_space<vmem>>, vector<16x128xf32>
    %c0_5 = arith.constant 0 : index
    %c0_6 = arith.constant 0 : index
    %9 = vector.load %arg3[%c0_5, %c0_6] : memref<16x32xf32, #tpu.memory_space<vmem>>, vector<16x32xf32>
    %c0_7 = arith.constant 0 : index
    %c0_8 = arith.constant 0 : index
    %10 = vector.load %arg4[%c0_7, %c0_8] : memref<32x128xf32, #tpu.memory_space<vmem>>, vector<32x128xf32>
    %cst = arith.constant dense<0.000000e+00> : vector<16x128xf32>
    %11 = tpu.matmul %9, %10, %cst {dimension_numbers = #tpu.dot_dimension_numbers<[1], [0], [0], [1], [0, 0, 1, 1], [], []>} : vector<16x32xf32>, vector<32x128xf32>, vector<16x128xf32> -> vector<16x128xf32>
    %12 = arith.addf %8, %11 : vector<16x128xf32>
    %c0_9 = arith.constant 0 : index
    %c0_10 = arith.constant 0 : index
    %13 = vector.load %arg8[%c0_9, %c0_10] : memref<16x128xf32, #tpu.memory_space<vmem>>, vector<16x128xf32>
    tpu.vector_store %arg8[%c0_9, %c0_10], %12 {strides = array<i32>} : memref<16x128xf32, #tpu.memory_space<vmem>>, vector<16x128xf32>,
    %c0_i32_11 = arith.constant 0 : i32
    %14 = arith.cmpi eq, %arg2, %c0_i32_11 : i32
    %15 = arith.extui %14 : i1 to i32
    %c0_i32_12 = arith.constant 0 : i32
    %16 = arith.cmpi ne, %15, %c0_i32_12 : i32
    scf.if %16 {
      %c0_16 = arith.constant 0 : index
      %c0_17 = arith.constant 0 : index
      %22 = vector.load %arg8[%c0_16, %c0_17] : memref<16x128xf32, #tpu.memory_space<vmem>>, vector<16x128xf32>
      %c0_18 = arith.constant 0 : index
      %c0_19 = arith.constant 0 : index
      %23 = vector.load %arg5[%c0_18, %c0_19] : memref<1x128xf32, #tpu.memory_space<vmem>>, vector<1x128xf32>
      %24 = vector.broadcast %23 : vector<1x128xf32> to vector<16x128xf32>
      %25 = arith.addf %22, %24 : vector<16x128xf32>
      %c0_20 = arith.constant 0 : index
      %c0_21 = arith.constant 0 : index
      %26 = vector.load %arg6[%c0_20, %c0_21] : memref<16x128xf32, #tpu.memory_space<vmem>>, vector<16x128xf32>
      tpu.vector_store %arg6[%c0_20, %c0_21], %25 {strides = array<i32>} : memref<16x128xf32, #tpu.memory_space<vmem>>, vector<16x128xf32>,
      %c0_22 = arith.constant 0 : index
      %c0_23 = arith.constant 0 : index
      %27 = vector.load %arg9[%c0_22, %c0_23] : memref<16x1xf32, #tpu.memory_space<vmem>>, vector<16x1xf32>
      %cst_24 = arith.constant dense<0xFF800000> : vector<16xf32>
      %28 = vector.multi_reduction <maximumf>, %25, %cst_24 [1] : vector<16x128xf32> to vector<16xf32>
      %29 = vector.shape_cast %28 : vector<16xf32> to vector<16x1xf32>
      %30 = arith.maximumf %27, %29 : vector<16x1xf32>
      %c0_25 = arith.constant 0 : index
      %c0_26 = arith.constant 0 : index
      %31 = vector.load %arg10[%c0_25, %c0_26] : memref<16x1xf32, #tpu.memory_space<vmem>>, vector<16x1xf32>
      %32 = arith.subf %27, %30 : vector<16x1xf32>
      %33 = math.exp %32 : vector<16x1xf32>
      %34 = arith.mulf %31, %33 : vector<16x1xf32>
      %35 = vector.broadcast %30 : vector<16x1xf32> to vector<16x128xf32>
      %36 = arith.subf %25, %35 : vector<16x128xf32>
      %37 = math.exp %36 : vector<16x128xf32>
      %cst_27 = arith.constant dense<0.000000e+00> : vector<16xf32>
      %38 = vector.multi_reduction <add>, %37, %cst_27 [1] : vector<16x128xf32> to vector<16xf32>
      %39 = vector.shape_cast %38 : vector<16xf32> to vector<16x1xf32>
      %40 = arith.addf %34, %39 : vector<16x1xf32>
      %c0_28 = arith.constant 0 : index
      %c0_29 = arith.constant 0 : index
      %41 = vector.load %arg10[%c0_28, %c0_29] : memref<16x1xf32, #tpu.memory_space<vmem>>, vector<16x1xf32>
      tpu.vector_store %arg10[%c0_28, %c0_29], %40 {strides = array<i32>} : memref<16x1xf32, #tpu.memory_space<vmem>>, vector<16x1xf32>,
      %c0_30 = arith.constant 0 : index
      %c0_31 = arith.constant 0 : index
      %42 = vector.load %arg9[%c0_30, %c0_31] : memref<16x1xf32, #tpu.memory_space<vmem>>, vector<16x1xf32>
      tpu.vector_store %arg9[%c0_30, %c0_31], %30 {strides = array<i32>} : memref<16x1xf32, #tpu.memory_space<vmem>>, vector<16x1xf32>,
    } else {
    }
    %c0_i32_13 = arith.constant 0 : i32
    %17 = arith.cmpi eq, %arg2, %c0_i32_13 : i32
    %c0_i32_14 = arith.constant 0 : i32
    %18 = arith.cmpi eq, %arg1, %c0_i32_14 : i32
    %19 = arith.andi %17, %18 : i1
    %20 = arith.extui %19 : i1 to i32
    %c0_i32_15 = arith.constant 0 : i32
    %21 = arith.cmpi ne, %20, %c0_i32_15 : i32
    scf.if %21 {
      %c0_16 = arith.constant 0 : index
      %c0_17 = arith.constant 0 : index
      %22 = vector.load %arg9[%c0_16, %c0_17] : memref<16x1xf32, #tpu.memory_space<vmem>>, vector<16x1xf32>
      %c0_18 = arith.constant 0 : index
      %c0_19 = arith.constant 0 : index
      %23 = vector.load %arg10[%c0_18, %c0_19] : memref<16x1xf32, #tpu.memory_space<vmem>>, vector<16x1xf32>
      %24 = math.log %23 : vector<16x1xf32>
      %25 = arith.addf %22, %24 : vector<16x1xf32>
      %c0_20 = arith.constant 0 : index
      %c0_21 = arith.constant 0 : index
      %26 = vector.load %arg7[%c0_20, %c0_21] : memref<16x1xf32, #tpu.memory_space<vmem>>, vector<16x1xf32>
      tpu.vector_store %arg7[%c0_20, %c0_21], %25 {strides = array<i32>} : memref<16x1xf32, #tpu.memory_space<vmem>>, vector<16x1xf32>,
    } else {
    }
    return
  }
  func.func @transform_0(%arg0: i32, %arg1: i32, %arg2: i32) -> (i32, i32) {
    %c0_i32 = arith.constant 0 : i32
    return %arg0, %arg2 : i32, i32
  }
  func.func @transform_1(%arg0: i32, %arg1: i32, %arg2: i32) -> (i32, i32) {
    %c0_i32 = arith.constant 0 : i32
    return %arg2, %arg1 : i32, i32
  }
  func.func @transform_2(%arg0: i32, %arg1: i32, %arg2: i32) -> (i32, i32) {
    %c0_i32 = arith.constant 0 : i32
    %c0_i32_0 = arith.constant 0 : i32
    return %c0_i32, %arg1 : i32, i32
  }
  func.func @transform_3(%arg0: i32, %arg1: i32, %arg2: i32) -> (i32, i32) {
    %c0_i32 = arith.constant 0 : i32
    return %arg0, %arg1 : i32, i32
  }
  func.func @transform_4(%arg0: i32, %arg1: i32, %arg2: i32) -> (i32, i32) {
    %c0_i32 = arith.constant 0 : i32
    %c0_i32_0 = arith.constant 0 : i32
    return %arg0, %c0_i32 : i32, i32
  }
}

</mosaic_0001>

<llo_original>
// kernel: tpu_custom_call.1
$region0: #{tpu_custom_call.1}
  #allocation0 [shape = 'u32[]', space=smem, size = 0x4, offset = 0x4, fixed_abs, tag = 'smem constant byte address 0x4 - core index']
  #allocation1 [shape = 'u32[72,128]{1,0:T(1,128)}', space=vmem, size = 0x9000, scoped, tag = 'internal scratch']
  #allocation2 [shape = 'f32[16,128]{1,0:T(8,128)}', space=vmem, size = 0x2000, scoped, tag = 'scratch operand']
  #allocation3 [shape = 'f32[16,1]{1,0:T(8,128)}', space=vmem, size = 0x2000, scoped, tag = 'scratch operand']
  #allocation4 [shape = 'f32[16,1]{1,0:T(8,128)}', space=vmem, size = 0x2000, scoped, tag = 'scratch operand']
  %s0 = inlined_call_operand.hbm [shape: f32[16,32], index: 0, kind: input, shape index: {}]
  %s1 = inlined_call_operand.hbm [shape: f32[32,128], index: 1, kind: input, shape index: {}]
  %s2 = inlined_call_operand.vmem [shape: f32[1,128], index: 2, kind: input, shape index: {}]
  %s3 = inlined_call_operand.hbm [shape: f32[16,128], index: 3, kind: output, shape index: {0}]
  %s4 = inlined_call_operand.vmem [shape: f32[16,1], index: 4, kind: output, shape index: {1}]
  %5 = xla_tuple %s3, %s4
  %s6 = sld [smem:[#allocation0]]
  $region54: #{tpu_custom_call.1} parent=0
    _
  %s8 = ssub.s32 1, %s6
  %s9 = scalar_select 0, %s8, %s6
  $region1: #{tpu_custom_call.1} parent=0
    #allocation5 [shape = 'u8[8192]{0}', space=vmem, size = 0x2000, scoped, tag = 'input window, operand 0, single buffered']
    #allocation6 [shape = 's32[1]{0}', space=sflag, size = 0x4, scoped, tag = 'scoped memory for tpu_custom_call.1']
    #allocation7 [shape = 's32[1]{0}', space=sflag, size = 0x4, scoped, tag = 'scoped memory for tpu_custom_call.1']
    #allocation8 [shape = 'u8[16384]{0}', space=vmem, size = 0x4000, scoped, tag = 'input window, operand 1, single buffered']
    #allocation9 [shape = 's32[1]{0}', space=sflag, size = 0x4, scoped, tag = 'scoped memory for tpu_custom_call.1']
    #allocation10 [shape = 'u8[8192]{0}', space=vmem, size = 0x2000, scoped, tag = 'output window, operand 0, single buffered']
    %10 = vsyncpa [#allocation6], 0
    %11 = vsyncpa [#allocation9], 0
    %12 = vsyncpa [#allocation7], 0
    // Predicated region
    $region2: #{tpu_custom_call.1} parent=1 // pred_check
      _
    $region3: #{tpu_custom_call.1} parent=1 // pred_check_branch
      %14 = sbr.rel (0) target = $region5
    $region4: #{tpu_custom_call.1} parent=1 // pred_region
      %16 = vsyncadd [#allocation6], 0
      %s17 = sshll.u32 %s0, 4
      %s18 = int_to_ptr.hbm [resolvable:$true] %s17
      %s19 = sshll.u32 [#allocation5], 4
      %s20 = int_to_ptr.vmem [resolvable:$true] %s19
      %25 = dma.hbm_to_vmem [thread:$0]  %s18, 256, %s20, [#allocation6], 128, 128, 8
    $region5: #{tpu_custom_call.1} parent=1 // pred_fallthru
      _
    // Predicated region
    $region6: #{tpu_custom_call.1} parent=1 // pred_check
      _
    $region7: #{tpu_custom_call.1} parent=1 // pred_check_branch
      %27 = sbr.rel (0) target = $region9
    $region8: #{tpu_custom_call.1} parent=1 // pred_region
      %29 = vsyncadd [#allocation9], 0
      %s30 = sshll.u32 %s1, 4
      %s31 = int_to_ptr.hbm [resolvable:$true] %s30
      %s32 = sshll.u32 [#allocation8], 4
      %s33 = int_to_ptr.vmem [resolvable:$true] %s32
      %38 = dma.hbm_to_vmem [thread:$0]  %s31, 512, %s33, [#allocation9], 128, 128, 8
    $region9: #{tpu_custom_call.1} parent=1 // pred_fallthru
      _
    // Predicated region
    $region10: #{tpu_custom_call.1} parent=1 // pred_check
      _
    $region11: #{tpu_custom_call.1} parent=1 // pred_check_branch
      %40 = sbr.rel (0) target = $region13
    $region12: #{tpu_custom_call.1} parent=1 // pred_region
      _
    $region13: #{tpu_custom_call.1} parent=1 // pred_fallthru
      _
    // Predicated region
    $region14: #{tpu_custom_call.1} parent=1 // pred_check
      _
    $region15: #{tpu_custom_call.1} parent=1 // pred_check_branch
      %42 = sbr.rel (0) target = $region17
    $region16: #{tpu_custom_call.1} parent=1 // pred_region
      %44 = dma.done [#allocation6], 256
    $region17: #{tpu_custom_call.1} parent=1 // pred_fallthru
      _
    // Predicated region
    $region18: #{tpu_custom_call.1} parent=1 // pred_check
      _
    $region19: #{tpu_custom_call.1} parent=1 // pred_check_branch
      %46 = sbr.rel (0) target = $region21
    $region20: #{tpu_custom_call.1} parent=1 // pred_region
      %48 = dma.done [#allocation9], 512
    $region21: #{tpu_custom_call.1} parent=1 // pred_fallthru
      _
    %p49 = scmp.eq.s32.totalorder 0, 0
    %p50 = scmp.eq.s32.totalorder 0, 0
    %p51 = pnand %p49, %p50
    %p52 = pneg %p51
    // Predicated region
    $region22: #{tpu_custom_call.1} parent=1 // pred_check
      _
    $region23: #{tpu_custom_call.1} parent=1 // pred_check_branch
      %54 = sbr.rel (%p51) target = $region25
    $region24: #{tpu_custom_call.1} parent=1 // pred_region
      %vm55 = vcmask 7168
      %56 = vst.msk [vmem:[#allocation3] sm:$0xff] %vm55, -inf
      %57 = vst.msk [vmem:[#allocation3 + $0x8] sm:$0xff] %vm55, -inf
      %58 = vst.msk [vmem:[#allocation4] sm:$0xff] %vm55, 0.0
      %59 = vst.msk [vmem:[#allocation4 + $0x8] sm:$0xff] %vm55, 0.0
    $region25: #{tpu_custom_call.1} parent=1 // pred_fallthru
      _
    // Predicated region
    $region26: #{tpu_custom_call.1} parent=1 // pred_check
      %p60 = pneg %p50
    $region27: #{tpu_custom_call.1} parent=1 // pred_check_branch
      %62 = sbr.rel (%p60) target = $region29
    $region28: #{tpu_custom_call.1} parent=1 // pred_region
      %63 = vst [vmem:[#allocation2] sm:$0xff] 0.0
      %64 = vst [vmem:[#allocation2 + $0x8] sm:$0xff] 0.0
    $region29: #{tpu_custom_call.1} parent=1 // pred_fallthru
      _
    %v65 = vld [vmem:[#allocation2] sm:$0xff]
    %v66 = vld [vmem:[#allocation2 + $0x8] sm:$0xff]
    %v67 = vld [vmem:[#allocation5] sm:$0xff]
    %v68 = vld [vmem:[#allocation5 + $0x8] sm:$0xff]
    %v69 = vld [vmem:[#allocation8] sm:$0xff]
    %v70 = vld [vmem:[#allocation8 + $0x8] sm:$0xff]
    %v71 = vld [vmem:[#allocation8 + $0x10] sm:$0xff]
    %v72 = vld [vmem:[#allocation8 + $0x18] sm:$0xff]
    %vm73 = vcmask 261120
    %v75 = vsel %vm73, %v67, 0
    %v78 = vsel %vm73, %v68, 0
    %80 = vmatpush.msra.mxu0 0.0
    %81 = vmatpush.msra.mxu0 0.0
    %82 = vmatpush.msra.mxu0 0.0
    %83 = vmatpush.msra.mxu0 0.0
    %84 = vmatpush.msra.mxu0 0.0
    %85 = vmatpush.msra.mxu0 0.0
    %86 = vmatpush.msra.mxu0 0.0
    %87 = vmatpush.msra.mxu0 0.0
    %88 = vmatpush.msra.mxu0 0.0
    %89 = vmatpush.msra.mxu0 0.0
    %90 = vmatpush.msra.mxu0 0.0
    %91 = vmatpush.msra.mxu0 0.0
    %92 = vmatpush.msra.mxu0 %v72
    %93 = vmatpush.msra.mxu0 %v71
    %94 = vmatpush.msra.mxu0 %v70
    %95 = vmatpush.msra.mxu0 %v69
    %96 = vmatmul.f32.gmra.mxu0 %v75
    %v97 = vpop.f32.mrf.mxu0
    %v98 = vadd.f32 0.0, %v97
    %99 = vmatmul.f32.gmra.mxu0 %v78
    %v100 = vpop.f32.mrf.mxu0
    %v101 = vadd.f32 0.0, %v100
    %102 = vdwg.mxu0
    %v103 = vadd.f32 %v65, %v98
    %v104 = vadd.f32 %v66, %v101
    %105 = vst [vmem:[#allocation2] sm:$0xff] %v103
    %106 = vst [vmem:[#allocation2 + $0x8] sm:$0xff] %v104
    // Predicated region
    $region30: #{tpu_custom_call.1} parent=1 // pred_check
      %p107 = pneg %p50
    $region31: #{tpu_custom_call.1} parent=1 // pred_check_branch
      %109 = sbr.rel (%p107) target = $region33
    $region32: #{tpu_custom_call.1} parent=1 // pred_region
      %v110 = vld [vmem:[#allocation2] sm:$0xff]
      %v111 = vld [vmem:[#allocation2 + $0x8] sm:$0xff]
      %v112 = vld [vmem:[%s2] sm:$0x1]
      %v114 = vperm.slane %v112, 0
      %v116 = vadd.f32 %v110, %v114
      %v117 = vadd.f32 %v111, %v114
      %118 = vst [vmem:[#allocation10] sm:$0xff] %v116
      %119 = vst [vmem:[#allocation10 + $0x8] sm:$0xff] %v117
      %v120 = vld [vmem:[#allocation3] sm:$0xff]
      %v121 = vld [vmem:[#allocation3 + $0x8] sm:$0xff]
      %122 = vmax.xlane.f32.xlu0 %v116
      %v123 = vpop.xlane.xlu0 %122
      %124 = vmax.xlane.f32.xlu0 %v117
      %v125 = vpop.xlane.xlu0 %124
      %v126 = vmax.f32 %v120, %v123
      %v127 = vmax.f32 %v121, %v125
      %v128 = vld [vmem:[#allocation4] sm:$0xff]
      %v129 = vld [vmem:[#allocation4 + $0x8] sm:$0xff]
      %v130 = vsub.f32 %v120, %v126
      %v131 = vsub.f32 %v121, %v127
      %v132 = vmul.f32 %v130, 1.442695
      %v133 = vpow.pop %v132
      %v134 = vmul.f32 %v131, 1.442695
      %v135 = vpow.pop %v134
      %v136 = vmul.f32 %v128, %v133
      %v137 = vmul.f32 %v129, %v135
      %139 = vset.pattern.permute.xlu0 0
      %140 = vperm.xlu0 %139, %v126
      %v141 = vpop.permute.xlu0 %140
      %144 = vset.pattern.permute.xlu0 0
      %145 = vperm.xlu0 %144, %v127
      %v146 = vpop.permute.xlu0 %145
      %v148 = vsub.f32 %v116, %v141
      %v149 = vsub.f32 %v117, %v146
      %v150 = vmul.f32 %v148, 1.442695
      %v151 = vpow.pop %v150
      %v152 = vmul.f32 %v149, 1.442695
      %v153 = vpow.pop %v152
      %154 = vadd.xlane.f32.xlu0 %v151
      %v155 = vpop.xlane.xlu0 %154
      %156 = vadd.xlane.f32.xlu0 %v153
      %v157 = vpop.xlane.xlu0 %156
      %v158 = vadd.f32 %v136, %v155
      %v159 = vadd.f32 %v137, %v157
      %vm160 = vcmask 7168
      %161 = vst.msk [vmem:[#allocation4] sm:$0xff] %vm160, %v158
      %162 = vst.msk [vmem:[#allocation4 + $0x8] sm:$0xff] %vm160, %v159
      %163 = vst.msk [vmem:[#allocation3] sm:$0xff] %vm160, %v126
      %164 = vst.msk [vmem:[#allocation3 + $0x8] sm:$0xff] %vm160, %v127
    $region33: #{tpu_custom_call.1} parent=1 // pred_fallthru
      _
    // Predicated region
    $region34: #{tpu_custom_call.1} parent=1 // pred_check
      _
    $region35: #{tpu_custom_call.1} parent=1 // pred_check_branch
      %166 = sbr.rel (%p51) target = $region37
    $region36: #{tpu_custom_call.1} parent=1 // pred_region
      %v167 = vld [vmem:[#allocation3] sm:$0xff]
      %v168 = vld [vmem:[#allocation3 + $0x8] sm:$0xff]
      %v169 = vld [vmem:[#allocation4] sm:$0xff]
      %v170 = vld [vmem:[#allocation4 + $0x8] sm:$0xff]
      %v171 = vlog2.pop %v169
      %v172 = vmul.f32 %v171, 0.6931472
      %v173 = vlog2.pop %v170
      %v174 = vmul.f32 %v173, 0.6931472
      %v175 = vadd.f32 %v167, %v172
      %v176 = vadd.f32 %v168, %v174
      %vm177 = vcmask 7168
      %178 = vst.msk [vmem:[%s4] sm:$0xff] %vm177, %v175
      %179 = vst.msk [vmem:[%s4 + $0x8] sm:$0xff] %vm177, %v176
    $region37: #{tpu_custom_call.1} parent=1 // pred_fallthru
      _
    // Predicated region
    $region38: #{tpu_custom_call.1} parent=1 // pred_check
      _
    $region39: #{tpu_custom_call.1} parent=1 // pred_check_branch
      %181 = sbr.rel (0) target = $region41
    $region40: #{tpu_custom_call.1} parent=1 // pred_region
      %183 = vsyncadd [#allocation7], 0
      %s184 = sshll.u32 [#allocation10], 4
      %s185 = int_to_ptr.vmem [resolvable:$true] %s184
      %s186 = sshll.u32 %s3, 4
      %s187 = int_to_ptr.hbm [resolvable:$true] %s186
      %192 = dma.vmem_to_hbm [thread:$0]  %s185, 256, %s187, [#allocation7], 128, 128, 8
    $region41: #{tpu_custom_call.1} parent=1 // pred_fallthru
      _
    // Predicated region
    $region42: #{tpu_custom_call.1} parent=1 // pred_check
      _
    $region43: #{tpu_custom_call.1} parent=1 // pred_check_branch
      %194 = sbr.rel (0) target = $region45
    $region44: #{tpu_custom_call.1} parent=1 // pred_region
      _
    $region45: #{tpu_custom_call.1} parent=1 // pred_fallthru
      _
    // Predicated region
    $region46: #{tpu_custom_call.1} parent=1 // pred_check
      _
    $region47: #{tpu_custom_call.1} parent=1 // pred_check_branch
      %196 = sbr.rel (0) target = $region49
    $region48: #{tpu_custom_call.1} parent=1 // pred_region
      %198 = dma.done [#allocation7], 256
    $region49: #{tpu_custom_call.1} parent=1 // pred_fallthru
      _
    // Predicated region
    $region50: #{tpu_custom_call.1} parent=1 // pred_check
      _
    $region51: #{tpu_custom_call.1} parent=1 // pred_check_branch
      %200 = sbr.rel (0) target = $region53
    $region52: #{tpu_custom_call.1} parent=1 // pred_region
      _
    $region53: #{tpu_custom_call.1} parent=1 // pred_fallthru
      _
    %201 = vsyncpa [#allocation6], 1
    %202 = vsyncpa [#allocation9], 1
    %203 = vsyncpa [#allocation7], 1

</llo_original>
